<compile_context>
chip_gen: v5e
topology: v5e:2x2
jax: 0.10.0
libtpu: 0.0.40
codegen_flags: <defaults>
</compile_context>

<pallas_src>
import functools

import jax
import jax.numpy as jnp
from jax.experimental import pallas as pl
from jax.experimental.pallas import tpu as pltpu


# ------------------------------- kernels ------------------------------------

def _std_kernel_fused(x_ref, yw_ref, w1_ref, o_ref, *, time_steps):
    """No K-split path.

    x_ref  : (TM, H)   TM = TB * time_steps flattened (batch, time) rows
    yw_ref : (TB, TN)  precomputed  y @ W2 + bias  rows (f32), one per batch
    w1_ref : (H, TN)   weight block multiplying the distributed input
    o_ref  : (TM, TN)
    """
    acc = jnp.dot(x_ref[...], w1_ref[...],
                  preferred_element_type=jnp.float32)          # (TM, TN) f32
    yw = yw_ref[...]                                           # (TB, TN) f32
    tb, tn = yw.shape
    # time_steps is padded to a multiple of 8 by the wrapper, so this collapse
    # is a free sublane-layout change (no relayout / gather).
    rows = jnp.broadcast_to(yw[:, None, :], (tb, time_steps, tn))
    acc = acc + rows.reshape(tb * time_steps, tn)
    o_ref[...] = acc.astype(o_ref.dtype)


def _std_kernel_ksplit(x_ref, yw_ref, w1_ref, o_ref, acc_ref, *, time_steps):
    """Large-H path: K grid axis over H with an f32 VMEM accumulator."""
    k = pl.program_id(2)

    @pl.when(k == 0)
    def _():
        acc_ref[...] = jnp.zeros_like(acc_ref)

    acc_ref[...] += jnp.dot(x_ref[...], w1_ref[...],
                            preferred_element_type=jnp.float32)

    @pl.when(k == pl.num_programs(2) - 1)
    def _():
        yw = yw_ref[...]                                       # (TB, TN) f32
        tb, tn = yw.shape
        rows = jnp.broadcast_to(yw[:, None, :], (tb, time_steps, tn))
        o_ref[...] = (acc_ref[...] + rows.reshape(tb * time_steps, tn)
                      ).astype(o_ref.dtype)


# ------------------------------ tile sizing ----------------------------------

def _round_up(x, m):
    return -(-x // m) * m


def _divisors(n):
    return [d for d in range(1, n + 1) if n % d == 0]


def _vmem_budget_bytes():
    """(per-TC VMEM budget with headroom, is_two_tensorcore_chip)."""
    cap = None
    try:
        info = pltpu.get_tpu_info()
        cap = int(getattr(info, "vmem_capacity_bytes", 0)) or None
    except Exception:
        cap = None
    if cap is None:
        cap = 64 << 20                 # conservative (v7x-sized) if unavailable
    if cap <= (64 << 20):              # v7x-class: 64 MiB physical, 2 TCs/chip
        return 48 << 20, True
    return min(cap - (32 << 20), 96 << 20), False   # v5e/v6e: 128 MiB physical


def _choose_tiles(B, Tp, H, D, cbytes, obytes, budget, prefer_two_steps):
    """VMEM-aware tile selection.

    Returns (Dp, TB, TN, TK): padded output width, batch rows per tile, output
    lanes per tile, contraction rows per tile.  TB | B, TN | Dp, TK | H, so
    every block is exact (no ragged edges feeding the MXU).
    """
    M = B * Tp
    x_bytes = M * H * cbytes
    row_align = {4: 8, 2: 16, 1: 32}.get(obytes, 8)

    # Valid TB values for the (TB, TN) yw block: sublane rule (mult of 8 or B).
    tb_cands = [d for d in _divisors(B) if d % 8 == 0 or d == B]
    # Candidate padded output widths: extra padding buys mid-size TN choices
    # for awkward D (e.g. D = 640 / 896) instead of dropping to TN = 128.
    dp_cands = sorted({_round_up(D, 128), _round_up(D, 256), _round_up(D, 512)})
    # TK: full H (no split) first, then 128-multiple divisors of H.
    tk_cands = [H] + [t for t in range(128, min(H, 2048) + 1, 128)
                      if H % t == 0 and t != H]

    best = None          # (key, config)
    fallback = None      # smallest-footprint config if nothing fits the budget
    for Dp in dp_cands:
        w_bytes = H * Dp * cbytes
        o_bytes = M * Dp * obytes
        tn_cands = [t for t in range(128, Dp + 1, 128) if Dp % t == 0]
        for TB in tb_cands:
            TM = TB * Tp
            store_pen = 0 if (TM % row_align == 0) else o_bytes // 4  # masked-store proxy
            for TN in tn_cands:
                for TK in tk_cands:
                    gi, gj, gk = M // TM, Dp // TN, H // TK
                    vmem = (2 * TM * TK * cbytes      # x tiles (double buffered)
                            + 2 * TK * TN * cbytes    # w1 tiles
                            + 2 * TB * TN * 4         # yw tiles (f32)
                            + 2 * TM * TN * obytes)   # out tiles
                    if gk > 1:
                        vmem += TM * TN * 4           # f32 accumulator scratch
                    if fallback is None or vmem < fallback[0]:
                        fallback = (vmem, (Dp, TB, TN, TK))
                    if vmem > budget:
                        continue
                    # Estimated HBM traffic (grid ordering later re-streams the
                    # cheaper operand when gk == 1).
                    if gk == 1:
                        traffic = (x_bytes + w_bytes
                                   + min((gi - 1) * w_bytes, (gj - 1) * x_bytes))
                    else:
                        traffic = gj * x_bytes + gi * w_bytes
                    traffic += o_bytes + gj * B * Dp * 4 + store_pen
                    steps = gi * gj * gk
                    cost = traffic + steps * 300_000   # ~0.35 us/step as bytes
                    if prefer_two_steps and gi * gj == 1:
                        cost = int(cost * 1.5)         # keep both v7x TCs fed
                    key = (cost, gk, -(TM * TN))
                    if best is None or key < best[0]:
                        best = (key, (Dp, TB, TN, TK))
    if best is not None:
        return best[1]
    # Nothing fits the budget (degenerate B / H combinations).
    # TODO(synk): pad B / H so even degenerate shapes can be tiled under budget.
    return fallback[1]


# -------------------------------- wrapper ------------------------------------

def single_time_distributed(x, y, w, bias, *, compute_dtype=None,
                            out_dtype=None, _tiles=None):
    """SingleTimeDistributed(Linear(2H, D), distribute_input=0)(x, y).

    x    : (B, T, H)  distributed input (flattened over time)
    y    : (B, H)     repeated input (broadcast over time)
    w    : (2H, D)    inner Linear weight (rows [:H] hit x, rows [H:] hit y)
    bias : (D,)
    compute_dtype : dtype for the x / W1 streams and MXU (bf16 is valid on
                    v5e/v6e/v7x; accumulation and the yw/bias add stay f32).
    out_dtype     : output dtype (default x.dtype); bf16 halves the largest
                    HBM write stream.
    _tiles        : optional (Dp, TB, TN, TK) override (testing / tuning).
    returns (B, T, D) in out_dtype.
    """
    B, T, H = x.shape
    D = w.shape[1]
    assert w.shape[0] == 2 * H, (w.shape, H)
    out_dtype = jnp.dtype(out_dtype or x.dtype)
    compute_dtype = jnp.dtype(compute_dtype or x.dtype)
    cbytes = compute_dtype.itemsize
    obytes = out_dtype.itemsize

    # ---- wrapper-side preprocessing (cheap XLA ops) ------------------------
    w1 = w[:H]                                    # multiplies distributed input
    w2 = w[H:]                                    # multiplies repeated input
    # Whole "repeated" branch precomputed once per batch row (kills the
    # degenerate M=1 matmul and the bias add inside the kernel); kept f32 so
    # the in-kernel broadcast-add stays on the f32 VPU path.
    yw = (y.astype(jnp.float32) @ w2.astype(jnp.float32)
          + bias.astype(jnp.float32)[None, :])    # (B, D) f32

    # Pad time so the in-kernel (TB, Tp, TN) <-> (TB*Tp, TN) collapse is a free
    # sublane-layout change (avoids a per-step relayout when T % 8 != 0).
    Tp = _round_up(T, 8)
    x_p = x if Tp == T else jnp.pad(x, ((0, 0), (0, Tp - T), (0, 0)))
    x_flat = x_p.reshape(B * Tp, H).astype(compute_dtype)   # the module's .view()
    M = B * Tp

    # ---- VMEM-aware tiling --------------------------------------------------
    budget, two_core = _vmem_budget_bytes()
    if _tiles is not None:
        Dp, TB, TN, TK = _tiles
        assert B % TB == 0 and Dp % TN == 0 and H % TK == 0 and Dp >= D
    else:
        Dp, TB, TN, TK = _choose_tiles(B, Tp, H, D, cbytes, obytes,
                                       budget, two_core)
    TM = TB * Tp
    gi, gj, gk = M // TM, Dp // TN, H // TK

    # Lane-dense (padded) output feature dim -> unmasked stores.
    if Dp != D:
        yw = jnp.pad(yw, ((0, 0), (0, Dp - D)))
        w1 = jnp.pad(w1, ((0, 0), (0, Dp - D)))
    w1 = w1.astype(compute_dtype)

    # Grid order: k innermost; put i or j outermost so the *smaller* operand is
    # the one re-streamed from HBM (W1 re-read gi times vs x re-read gj times).
    x_bytes = M * H * cbytes
    w_bytes = H * Dp * cbytes
    i_outer = (gi - 1) * w_bytes <= (gj - 1) * x_bytes
    if i_outer:
        grid = (gi, gj, gk)
        x_map = lambda i, j, k: (i, k)
        yw_map = lambda i, j, k: (i, j)
        w_map = lambda i, j, k: (k, j)
        o_map = lambda i, j, k: (i, j)
    else:
        grid = (gj, gi, gk)
        x_map = lambda j, i, k: (i, k)
        yw_map = lambda j, i, k: (i, j)
        w_map = lambda j, i, k: (k, j)
        o_map = lambda j, i, k: (i, j)

    if gk == 1:
        kernel = functools.partial(_std_kernel_fused, time_steps=Tp)
        scratch = []
    else:
        kernel = functools.partial(_std_kernel_ksplit, time_steps=Tp)
        scratch = [pltpu.VMEM((TM, TN), jnp.float32)]

    tile_bytes = (2 * TM * TK * cbytes + 2 * TK * TN * cbytes
                  + 2 * TB * TN * 4 + 2 * TM * TN * obytes
                  + (TM * TN * 4 if gk > 1 else 0))
    # Demand-driven scoped-VMEM request: tiles + compiler headroom, never the
    # full physical VMEM (important on v7x's 64 MiB).
    vmem_limit = int(max(32 << 20, tile_bytes + (8 << 20)))

    cost = pl.CostEstimate(
        flops=2 * M * H * Dp,
        transcendentals=0,
        bytes_accessed=int(x_bytes + w_bytes + B * Dp * 4 + M * Dp * obytes),
    )

    out_flat = pl.pallas_call(
        kernel,
        out_shape=jax.ShapeDtypeStruct((M, Dp), out_dtype),
        grid_spec=pltpu.PrefetchScalarGridSpec(
            num_scalar_prefetch=0,
            grid=grid,
            in_specs=[
                # distributed-input rows for this M-tile / K-slice
                pl.BlockSpec((TM, TK), x_map),
                # precomputed repeated-branch rows for the batches in this tile
                pl.BlockSpec((TB, TN), yw_map),
                # weight block (K-slice x output-lane block)
                pl.BlockSpec((TK, TN), w_map),
            ],
            out_specs=pl.BlockSpec((TM, TN), o_map),
            scratch_shapes=scratch,
        ),
        compiler_params=pltpu.CompilerParams(
            dimension_semantics=("parallel", "parallel", "arbitrary"),
            vmem_limit_bytes=vmem_limit,
        ),
        cost_estimate=cost,
    )(x_flat, yw, w1)

    out = out_flat.reshape(B, Tp, Dp)
    if Tp != T or Dp != D:
        out = out[:, :T, :D]
    return out


def _reference(x, y, w, bias):
    """Pure-JAX mirror of the PyTorch wrapper + Linear(2H, D) inner module."""
    B, T, H = x.shape
    x_flat = x.reshape(B * T, H)                                          # distribute
    y_rep = jnp.broadcast_to(y[:, None, :], (B, T, H)).reshape(B * T, H)  # repeat
    feats = jnp.concatenate([x_flat, y_rep], axis=-1)                     # (B*T, 2H)
    out_flat = feats @ w + bias                                           # inner module
    return out_flat.reshape(B, T, -1)                                     # un-distribute


if __name__ == "__main__":
    key = jax.random.PRNGKey(0)

    def make(B, T, H, D, k):
        kx, ky, kw, kb = jax.random.split(k, 4)
        xx = jax.random.normal(kx, (B, T, H), dtype=jnp.float32)
        yy = jax.random.normal(ky, (B, H), dtype=jnp.float32)
        ww = jax.random.normal(kw, (2 * H, D), dtype=jnp.float32) * 0.05
        bb = jax.random.normal(kb, (D,), dtype=jnp.float32) * 0.05
        return xx, yy, ww, bb

    k1, k2, k3 = jax.random.split(key, 3)

    # 1) aligned shapes: f32 exact path and bf16-compute path.
    x, y, w, b = make(2, 8, 32, 32, k1)
    ref = _reference(x, y, w, b)
    out = jax.block_until_ready(single_time_distributed(x, y, w, b))
    assert out.shape == (2, 8, 32), out.shape
    assert jnp.allclose(out, ref, atol=1e-4, rtol=1e-4), "f32 mismatch"
    out_bf = jax.block_until_ready(
        single_time_distributed(x, y, w, b, compute_dtype=jnp.bfloat16))
    assert jnp.allclose(out_bf.astype(jnp.float32), ref,
                        atol=5e-2, rtol=5e-2), "bf16-compute mismatch"

    # 2) unaligned time / feature dims (exercises the Tp and Dp padding paths).
    x, y, w, b = make(2, 5, 32, 48, k2)
    ref = _reference(x, y, w, b)
    out = jax.block_until_ready(single_time_distributed(x, y, w, b))
    assert out.shape == (2, 5, 48), out.shape
    assert jnp.allclose(out, ref, atol=1e-4, rtol=1e-4), "padded-shape mismatch"

    # 3) K-split accumulator kernel (large-H / v7x path), forced via _tiles.
    x, y, w, b = make(2, 8, 256, 128, k3)
    ref = _reference(x, y, w, b)
    out = jax.block_until_ready(
        single_time_distributed(x, y, w, b, _tiles=(128, 2, 128, 128)))
    assert out.shape == (2, 8, 128), out.shape
    assert jnp.allclose(out, ref, atol=1e-4, rtol=1e-4), "K-split mismatch"

    # 4) bf16 output path (halves the output HBM stream).
    out = jax.block_until_ready(
        single_time_distributed(x, y, w, b, out_dtype=jnp.bfloat16))
    assert out.dtype == jnp.bfloat16
    assert jnp.allclose(out.astype(jnp.float32), ref,
                        atol=5e-2, rtol=5e-2), "bf16-out mismatch"

    print("KERNEL_OK")
</pallas_src>

<mosaic_0001>
module attributes {stable_mosaic.version = 11 : i64} {
  func.func @_std_kernel_fused(%arg0: i32, %arg1: i32, %arg2: i32, %arg3: memref<16x32xf32, #tpu.memory_space<vmem>>, %arg4: memref<2x128xf32, #tpu.memory_space<vmem>>, %arg5: memref<32x128xf32, #tpu.memory_space<vmem>>, %arg6: memref<16x128xf32, #tpu.memory_space<vmem>>) attributes {dimension_semantics = [#tpu.dimension_semantics<parallel>, #tpu.dimension_semantics<parallel>, #tpu.dimension_semantics<arbitrary>], iteration_bounds = array<i64: 1, 1, 1>, scalar_prefetch = 0 : i64, scratch_operands = 0 : i64, tpu.core_type = #tpu.core_type<tc>, window_params = [{transform_indices = @transform_0, window_bounds = array<i64: 16, 32>}, {transform_indices = @transform_1, window_bounds = array<i64: 2, 128>}, {transform_indices = @transform_2, window_bounds = array<i64: 32, 128>}, {transform_indices = @transform_3, window_bounds = array<i64: 16, 128>}]} {
    %c0 = arith.constant 0 : index
    %c0_0 = arith.constant 0 : index
    %0 = vector.load %arg3[%c0, %c0_0] : memref<16x32xf32, #tpu.memory_space<vmem>>, vector<16x32xf32>
    %c0_1 = arith.constant 0 : index
    %c0_2 = arith.constant 0 : index
    %1 = vector.load %arg5[%c0_1, %c0_2] : memref<32x128xf32, #tpu.memory_space<vmem>>, vector<32x128xf32>
    %cst = arith.constant dense<0.000000e+00> : vector<16x128xf32>
    %2 = tpu.matmul %0, %1, %cst {dimension_numbers = #tpu.dot_dimension_numbers<[1], [0], [0], [1], [0, 0, 1, 1], [], []>} : vector<16x32xf32>, vector<32x128xf32>, vector<16x128xf32> -> vector<16x128xf32>
    %c0_3 = arith.constant 0 : index
    %c0_4 = arith.constant 0 : index
    %3 = vector.load %arg4[%c0_3, %c0_4] : memref<2x128xf32, #tpu.memory_space<vmem>>, vector<2x128xf32>
    %4 = vector.shape_cast %3 : vector<2x128xf32> to vector<2x1x128xf32>
    %5 = vector.shape_cast %4 : vector<2x1x128xf32> to vector<2x1x128xf32>
    %6 = vector.broadcast %5 : vector<2x1x128xf32> to vector<2x8x128xf32>
    %7 = vector.shape_cast %6 : vector<2x8x128xf32> to vector<16x128xf32>
    %8 = arith.addf %2, %7 : vector<16x128xf32>
    %c0_5 = arith.constant 0 : index
    %c0_6 = arith.constant 0 : index
    %9 = vector.load %arg6[%c0_5, %c0_6] : memref<16x128xf32, #tpu.memory_space<vmem>>, vector<16x128xf32>
    tpu.vector_store %arg6[%c0_5, %c0_6], %8 {strides = array<i32>} : memref<16x128xf32, #tpu.memory_space<vmem>>, vector<16x128xf32>,
    return
  }
  func.func @transform_0(%arg0: i32, %arg1: i32, %arg2: i32) -> (i32, i32) {
    %c0_i32 = arith.constant 0 : i32
    return %arg0, %arg2 : i32, i32
  }
  func.func @transform_1(%arg0: i32, %arg1: i32, %arg2: i32) -> (i32, i32) {
    %c0_i32 = arith.constant 0 : i32
    return %arg0, %arg1 : i32, i32
  }
  func.func @transform_2(%arg0: i32, %arg1: i32, %arg2: i32) -> (i32, i32) {
    %c0_i32 = arith.constant 0 : i32
    return %arg2, %arg1 : i32, i32
  }
  func.func @transform_3(%arg0: i32, %arg1: i32, %arg2: i32) -> (i32, i32) {
    %c0_i32 = arith.constant 0 : i32
    return %arg0, %arg1 : i32, i32
  }
}

</mosaic_0001>

<llo_original>
// kernel: tpu_custom_call.1
$region0: #{tpu_custom_call.1}
  #allocation0 [shape = 'u32[]', space=smem, size = 0x4, offset = 0x4, fixed_abs, tag = 'smem constant byte address 0x4 - core index']
  #allocation1 [shape = 'u32[72,128]{1,0:T(1,128)}', space=vmem, size = 0x9000, scoped, tag = 'internal scratch']
  %s0 = inlined_call_operand.hbm [shape: f32[16,32], index: 0, kind: input, shape index: {}]
  %s1 = inlined_call_operand.hbm [shape: f32[2,128], index: 1, kind: input, shape index: {}]
  %s2 = inlined_call_operand.hbm [shape: f32[32,128], index: 2, kind: input, shape index: {}]
  %s3 = inlined_call_operand.hbm [shape: f32[16,128], index: 3, kind: output, shape index: {}]
  %s4 = sld [smem:[#allocation0]]
  $region34: #{tpu_custom_call.1} parent=0
    _
  %s6 = ssub.s32 1, %s4
  %s7 = scalar_select 0, %s6, %s4
  $region1: #{tpu_custom_call.1} parent=0
    #allocation2 [shape = 'u8[8192]{0}', space=vmem, size = 0x2000, scoped, tag = 'input window, operand 0, single buffered']
    #allocation3 [shape = 's32[1]{0}', space=sflag, size = 0x4, scoped, tag = 'scoped memory for tpu_custom_call.1']
    #allocation4 [shape = 's32[1]{0}', space=sflag, size = 0x4, scoped, tag = 'scoped memory for tpu_custom_call.1']
    #allocation5 [shape = 'u8[1024]{0}', space=vmem, size = 0x400, scoped, tag = 'input window, operand 1, single buffered']
    #allocation6 [shape = 's32[1]{0}', space=sflag, size = 0x4, scoped, tag = 'scoped memory for tpu_custom_call.1']
    #allocation7 [shape = 'u8[16384]{0}', space=vmem, size = 0x4000, scoped, tag = 'input window, operand 2, single buffered']
    #allocation8 [shape = 'u8[8192]{0}', space=vmem, size = 0x2000, scoped, tag = 'output window, operand 0, single buffered']
    %8 = vsyncpa [#allocation3], 0
    %9 = vsyncpa [#allocation6], 0
    %10 = vsyncpa [#allocation4], 0
    // Predicated region
    $region2: #{tpu_custom_call.1} parent=1 // pred_check
      _
    $region3: #{tpu_custom_call.1} parent=1 // pred_check_branch
      %12 = sbr.rel (0) target = $region5
    $region4: #{tpu_custom_call.1} parent=1 // pred_region
      %14 = vsyncadd [#allocation3], 0
      %s15 = sshll.u32 %s0, 4
      %s16 = int_to_ptr.hbm [resolvable:$true] %s15
      %s17 = sshll.u32 [#allocation2], 4
      %s18 = int_to_ptr.vmem [resolvable:$true] %s17
      %23 = dma.hbm_to_vmem [thread:$0]  %s16, 256, %s18, [#allocation3], 128, 128, 8
    $region5: #{tpu_custom_call.1} parent=1 // pred_fallthru
      _
    // Predicated region
    $region6: #{tpu_custom_call.1} parent=1 // pred_check
      _
    $region7: #{tpu_custom_call.1} parent=1 // pred_check_branch
      %25 = sbr.rel (0) target = $region9
    $region8: #{tpu_custom_call.1} parent=1 // pred_region
      %27 = vsyncadd [#allocation6], 0
      %s29 = sshll.u32 %s1, 4
      %s30 = int_to_ptr.hbm [resolvable:$true] %s29
      %s31 = sshll.u32 [#allocation5], 4
      %s32 = int_to_ptr.vmem [resolvable:$true] %s31
      %34 = dma.hbm_to_vmem [thread:$0]  %s30, 32, %s32, [#allocation6]
    $region9: #{tpu_custom_call.1} parent=1 // pred_fallthru
      _
    // Predicated region
    $region10: #{tpu_custom_call.1} parent=1 // pred_check
      _
    $region11: #{tpu_custom_call.1} parent=1 // pred_check_branch
      %36 = sbr.rel (0) target = $region13
    $region12: #{tpu_custom_call.1} parent=1 // pred_region
      %38 = vsyncadd [#allocation6], 0
      %s39 = sshll.u32 %s2, 4
      %s40 = int_to_ptr.hbm [resolvable:$true] %s39
      %s41 = sshll.u32 [#allocation7], 4
      %s42 = int_to_ptr.vmem [resolvable:$true] %s41
      %47 = dma.hbm_to_vmem [thread:$0]  %s40, 512, %s42, [#allocation6], 128, 128, 8
    $region13: #{tpu_custom_call.1} parent=1 // pred_fallthru
      _
    // Predicated region
    $region14: #{tpu_custom_call.1} parent=1 // pred_check
      _
    $region15: #{tpu_custom_call.1} parent=1 // pred_check_branch
      %49 = sbr.rel (0) target = $region17
    $region16: #{tpu_custom_call.1} parent=1 // pred_region
      %51 = dma.done [#allocation3], 256
    $region17: #{tpu_custom_call.1} parent=1 // pred_fallthru
      _
    // Predicated region
    $region18: #{tpu_custom_call.1} parent=1 // pred_check
      _
    $region19: #{tpu_custom_call.1} parent=1 // pred_check_branch
      %53 = sbr.rel (0) target = $region21
    $region20: #{tpu_custom_call.1} parent=1 // pred_region
      %55 = dma.done [#allocation6], 32
    $region21: #{tpu_custom_call.1} parent=1 // pred_fallthru
      _
    // Predicated region
    $region22: #{tpu_custom_call.1} parent=1 // pred_check
      _
    $region23: #{tpu_custom_call.1} parent=1 // pred_check_branch
      %57 = sbr.rel (0) target = $region25
    $region24: #{tpu_custom_call.1} parent=1 // pred_region
      %59 = dma.done [#allocation6], 512
    $region25: #{tpu_custom_call.1} parent=1 // pred_fallthru
      _
    %v60 = vld [vmem:[#allocation2] sm:$0xff]
    %v61 = vld [vmem:[#allocation2 + $0x8] sm:$0xff]
    %v62 = vld [vmem:[#allocation7] sm:$0xff]
    %v63 = vld [vmem:[#allocation7 + $0x8] sm:$0xff]
    %v64 = vld [vmem:[#allocation7 + $0x10] sm:$0xff]
    %v65 = vld [vmem:[#allocation7 + $0x18] sm:$0xff]
    %v66 = vld [vmem:[#allocation5] sm:$0x3]
    %v68 = vrot.slane %v66, 1
    %v69 = vperm.slane %v66, 0
    %v70 = vperm.slane %v68, 0
    %vm73 = vcmask 261120
    %v75 = vsel %vm73, %v60, 0
    %v78 = vsel %vm73, %v61, 0
    %80 = vmatpush.msra.mxu0 0.0
    %81 = vmatpush.msra.mxu0 0.0
    %82 = vmatpush.msra.mxu0 0.0
    %83 = vmatpush.msra.mxu0 0.0
    %84 = vmatpush.msra.mxu0 0.0
    %85 = vmatpush.msra.mxu0 0.0
    %86 = vmatpush.msra.mxu0 0.0
    %87 = vmatpush.msra.mxu0 0.0
    %88 = vmatpush.msra.mxu0 0.0
    %89 = vmatpush.msra.mxu0 0.0
    %90 = vmatpush.msra.mxu0 0.0
    %91 = vmatpush.msra.mxu0 0.0
    %92 = vmatpush.msra.mxu0 %v65
    %93 = vmatpush.msra.mxu0 %v64
    %94 = vmatpush.msra.mxu0 %v63
    %95 = vmatpush.msra.mxu0 %v62
    %96 = vmatmul.f32.gmra.mxu0 %v75
    %v97 = vpop.f32.mrf.mxu0
    %v98 = vadd.f32 %v69, %v97
    %99 = vmatmul.f32.gmra.mxu0 %v78
    %v100 = vpop.f32.mrf.mxu0
    %v101 = vadd.f32 %v70, %v100
    %102 = vdwg.mxu0
    %103 = vst [vmem:[#allocation8] sm:$0xff] %v98
    %104 = vst [vmem:[#allocation8 + $0x8] sm:$0xff] %v101
    // Predicated region
    $region26: #{tpu_custom_call.1} parent=1 // pred_check
      _
    $region27: #{tpu_custom_call.1} parent=1 // pred_check_branch
      %106 = sbr.rel (0) target = $region29
    $region28: #{tpu_custom_call.1} parent=1 // pred_region
      %108 = vsyncadd [#allocation4], 0
      %s109 = sshll.u32 [#allocation8], 4
      %s110 = int_to_ptr.vmem [resolvable:$true] %s109
      %s111 = sshll.u32 %s3, 4
      %s112 = int_to_ptr.hbm [resolvable:$true] %s111
      %117 = dma.vmem_to_hbm [thread:$0]  %s110, 256, %s112, [#allocation4], 128, 128, 8
    $region29: #{tpu_custom_call.1} parent=1 // pred_fallthru
      _
    // Predicated region
    $region30: #{tpu_custom_call.1} parent=1 // pred_check
      _
    $region31: #{tpu_custom_call.1} parent=1 // pred_check_branch
      %119 = sbr.rel (0) target = $region33
    $region32: #{tpu_custom_call.1} parent=1 // pred_region
      %121 = dma.done [#allocation4], 256
    $region33: #{tpu_custom_call.1} parent=1 // pred_fallthru
      _
    %122 = vsyncpa [#allocation3], 1
    %123 = vsyncpa [#allocation6], 1
    %124 = vsyncpa [#allocation4], 1

</llo_original>
